<compile_context>
chip_gen: v5e
topology: v5e:2x2
jax: 0.10.0
libtpu: 0.0.40
codegen_flags: <defaults>
</compile_context>

<pallas_src>
import functools

import jax
import jax.numpy as jnp
from jax import lax
from jax.experimental import pallas as pl
from jax.experimental.pallas import tpu as pltpu

EPS = 1e-6

_SUB, _LANE = 8, 128
_GROUP = _SUB * _LANE              # 1024 elements = one f32 vreg
_MAX_GROUPS_PER_BLOCK = 1024       # 4 MiB f32 per input per grid step (streamed)
_PACK_BUDGET_GROUPS = 512          # 2 MiB f32 per input per grid step (packed)
_SMALL_GROUPS = 256                # per-sample <= 1 MiB f32 -> packed path
_CHUNK = 8                         # vreg-groups fused per inner-loop iteration
_VMEM_LIMIT = 32 * 1024 * 1024     # > v5e 16 MiB default, <= v6e/v7x scoped budget


def _sigmoid(x):
    # sigmoid(x) == 0.5 * tanh(0.5 * x) + 0.5 : single EUP push + VPU ops.
    return 0.5 * jnp.tanh(0.5 * x) + 0.5


# ---------------------------------------------------------------------------
# Packed path: small per-sample sizes, several samples per grid step.
# Block: (n_tile, groups, 8, 128); outputs: per-sample partial sums (n_tile, 1).
# ---------------------------------------------------------------------------
def _dice_packed_kernel(pred_ref, target_ref, pt_ref, p_ref, t_ref):
    x = pred_ref[...].astype(jnp.float32)
    t = target_ref[...].astype(jnp.float32)
    p = _sigmoid(x)

    def _rowsum(v):                                  # (n, g, 8, 128) -> (n, 1)
        s = jnp.sum(v, axis=1)                       # VPU adds over vreg-groups
        s = jnp.sum(s, axis=-1)                      # cross-lane (XLU)
        return jnp.sum(s, axis=-1, keepdims=True)    # cross-sublane

    pt_ref[...] = _rowsum(p * t)
    p_ref[...] = _rowsum(p)
    t_ref[...] = _rowsum(t)


# ---------------------------------------------------------------------------
# Streamed path: large per-sample sizes.
# Grid (N, split, k_steps); block (1, g_tile, 8, 128); per-(sample, split)
# partial sums accumulated in (8,128) VMEM scratch across the k axis.
# ---------------------------------------------------------------------------
def _dice_stream_kernel(pred_ref, target_ref, pt_ref, p_ref, t_ref,
                        pt_acc, p_acc, t_acc, *, k_steps, groups_total, ragged):
    s = pl.program_id(1)
    k = pl.program_id(2)
    g_tile = pred_ref.shape[1]
    n_chunks = g_tile // _CHUNK
    group_base = (s * k_steps + k) * g_tile          # first global group of block

    @pl.when(k == 0)
    def _init():
        pt_acc[...] = jnp.zeros_like(pt_acc)
        p_acc[...] = jnp.zeros_like(p_acc)
        t_acc[...] = jnp.zeros_like(t_acc)

    def body(c, carry):
        pt_c, p_c, t_c = carry
        off = pl.multiple_of(c * _CHUNK, _CHUNK)
        x = pred_ref[0, pl.ds(off, _CHUNK)].astype(jnp.float32)
        t = target_ref[0, pl.ds(off, _CHUNK)].astype(jnp.float32)
        p = _sigmoid(x)
        if ragged:
            # Edge blocks contain undefined data past `groups_total`; mask
            # every out-of-range vreg-group (covers NaN/Inf garbage too).
            gidx = group_base + off + lax.broadcasted_iota(
                jnp.int32, (_CHUNK, _SUB, _LANE), 0)
            valid = gidx < groups_total
            p = jnp.where(valid, p, 0.0)
            t = jnp.where(valid, t, 0.0)
        # Leading-axis sums are pure VPU vreg adds; XLU reduction is deferred
        # to the finalize step.
        pt_c = pt_c + jnp.sum(p * t, axis=0)
        p_c = p_c + jnp.sum(p, axis=0)
        t_c = t_c + jnp.sum(t, axis=0)
        return pt_c, p_c, t_c

    pt_c, p_c, t_c = lax.fori_loop(
        0, n_chunks, body, (pt_acc[...], p_acc[...], t_acc[...]))

    pt_acc[...] = pt_c
    p_acc[...] = p_c
    t_acc[...] = t_c

    @pl.when(k == k_steps - 1)
    def _finalize():
        pt_ref[...] = jnp.sum(pt_c, keepdims=True)
        p_ref[...] = jnp.sum(p_c, keepdims=True)
        t_ref[...] = jnp.sum(t_c, keepdims=True)


def dice_loss(pred, target):
    """Pallas implementation of DiceLoss.forward. Returns a scalar f32 loss."""
    assert pred.shape == target.shape
    N = pred.shape[0]
    L = 1
    for d in pred.shape[1:]:
        L *= d

    groups = -(-L // _GROUP)
    l_pad = groups * _GROUP

    pred_f = pred.reshape(N, L)
    tgt_f = target.reshape(N, L)
    if l_pad != L:
        # Only when L % 1024 != 0. Pad values are exact no-ops:
        # sigmoid(-1e9) == 0 (tanh form gives exactly 0) and target pad == 0.
        pad = l_pad - L
        pred_f = jnp.pad(pred_f, ((0, 0), (0, pad)), constant_values=-1e9)
        tgt_f = jnp.pad(tgt_f, ((0, 0), (0, pad)), constant_values=0.0)
    # Free (contiguous) reshape to the lane-dense (8,128)-vreg layout.
    pred_t = pred_f.reshape(N, groups, _SUB, _LANE)
    tgt_t = tgt_f.reshape(N, groups, _SUB, _LANE)

    if groups <= _SMALL_GROUPS:
        # ---- packed path: pack samples per step to keep DMAs large ----
        budget = max(1, _PACK_BUDGET_GROUPS // groups)
        n_tile = 1
        for d in range(min(N, budget), 0, -1):
            if N % d == 0:
                n_tile = d
                break
        in_spec = pl.BlockSpec((n_tile, groups, _SUB, _LANE),
                               lambda i: (i, 0, 0, 0))
        out_spec = pl.BlockSpec((n_tile, 1), lambda i: (i, 0))
        pt_s, p_s, t_s = pl.pallas_call(
            _dice_packed_kernel,
            out_shape=[jax.ShapeDtypeStruct((N, 1), jnp.float32)] * 3,
            grid_spec=pltpu.PrefetchScalarGridSpec(
                num_scalar_prefetch=0,
                grid=(N // n_tile,),
                in_specs=[in_spec, in_spec],
                out_specs=[out_spec, out_spec, out_spec],
            ),
            compiler_params=pltpu.CompilerParams(
                dimension_semantics=("parallel",),
                vmem_limit_bytes=_VMEM_LIMIT,
            ),
        )(pred_t, tgt_t)
    else:
        # ---- streamed path: 4 MiB-per-input blocks along the group axis ----
        if groups <= _MAX_GROUPS_PER_BLOCK:
            g_tile = -(-groups // _CHUNK) * _CHUNK
        else:
            g_tile = _MAX_GROUPS_PER_BLOCK
        total_blocks = -(-groups // g_tile)
        # Keep both v7x TensorCores busy when N == 1 by splitting the group
        # axis (only when it splits evenly, so no fully-out-of-range blocks).
        split = 2 if (N == 1 and total_blocks >= 2 and total_blocks % 2 == 0) else 1
        k_steps = total_blocks // split
        ragged = (split * k_steps * g_tile) != groups

        kernel = functools.partial(
            _dice_stream_kernel,
            k_steps=k_steps, groups_total=groups, ragged=ragged)

        in_spec = pl.BlockSpec(
            (1, g_tile, _SUB, _LANE),
            lambda i, s, k: (i, s * k_steps + k, 0, 0))
        out_spec = pl.BlockSpec((1, 1), lambda i, s, k: (i, s))

        pt_s, p_s, t_s = pl.pallas_call(
            kernel,
            out_shape=[jax.ShapeDtypeStruct((N, split), jnp.float32)] * 3,
            grid_spec=pltpu.PrefetchScalarGridSpec(
                num_scalar_prefetch=0,
                grid=(N, split, k_steps),
                in_specs=[in_spec, in_spec],
                out_specs=[out_spec, out_spec, out_spec],
                scratch_shapes=[pltpu.VMEM((_SUB, _LANE), jnp.float32)] * 3,
            ),
            compiler_params=pltpu.CompilerParams(
                dimension_semantics=("parallel", "parallel", "arbitrary"),
                vmem_limit_bytes=_VMEM_LIMIT,
            ),
        )(pred_t, tgt_t)

    # Tiny final math on N*split scalars: dice + batch mean in the wrapper.
    intersection = jnp.sum(pt_s, axis=1)
    cardinality = jnp.sum(p_s, axis=1) + jnp.sum(t_s, axis=1)
    dice = 2.0 * intersection / (cardinality + jnp.float32(EPS))
    return jnp.mean(1.0 - dice)


def dice_loss_ref(pred, target):
    """Pure-JAX reference for correctness checking."""
    predict = jax.nn.sigmoid(pred.astype(jnp.float32))
    tgt = target.astype(jnp.float32)
    dims = tuple(range(1, pred.ndim))
    intersection = jnp.sum(predict * tgt, axis=dims)
    cardinality = jnp.sum(predict + tgt, axis=dims)
    dice = 2.0 * intersection / (cardinality + EPS)
    return jnp.mean(1.0 - dice)


if __name__ == "__main__":
    root = jax.random.PRNGKey(0)

    def make(shape, k):
        kp, kt = jax.random.split(k)
        pred = jax.random.normal(kp, shape, dtype=jnp.float32)
        target = jax.random.bernoulli(kt, p=0.5, shape=shape).astype(jnp.float32)
        return pred, target

    cases = [
        # (shape, tolerance) — primary small case + coverage of both paths.
        ((2, 4, 16, 16), 1e-5),      # packed path, no padding (L == 1024)
        ((2, 3, 17, 19), 1e-5),      # packed path, ragged tail -> pad fallback
        ((2, 2, 550, 1024), 5e-4),   # streamed: multi-step accumulation + edge-block mask
        ((1, 2, 1024, 1024), 5e-4),  # streamed: N=1 -> group-axis split (megacore)
    ]
    keys = jax.random.split(root, len(cases))
    for (shape, tol), k in zip(cases, keys):
        pred, target = make(shape, k)
        out = jax.block_until_ready(dice_loss(pred, target))
        ref = jax.block_until_ready(dice_loss_ref(pred, target))
        assert jnp.allclose(out, ref, atol=tol, rtol=tol), (shape, out, ref)

    print("KERNEL_OK")
</pallas_src>

<mosaic_0001>
module attributes {stable_mosaic.version = 11 : i64} {
  func.func @_dice_packed_kernel(%arg0: i32, %arg1: memref<2x1x8x128xf32, #tpu.memory_space<vmem>>, %arg2: memref<2x1x8x128xf32, #tpu.memory_space<vmem>>, %arg3: memref<2x1xf32, #tpu.memory_space<vmem>>, %arg4: memref<2x1xf32, #tpu.memory_space<vmem>>, %arg5: memref<2x1xf32, #tpu.memory_space<vmem>>) attributes {dimension_semantics = [#tpu.dimension_semantics<parallel>], iteration_bounds = array<i64: 1>, scalar_prefetch = 0 : i64, scratch_operands = 0 : i64, tpu.core_type = #tpu.core_type<tc>, window_params = [{transform_indices = @transform_0, window_bounds = array<i64: 2, 1, 8, 128>}, {transform_indices = @transform_1, window_bounds = array<i64: 2, 1, 8, 128>}, {transform_indices = @transform_2, window_bounds = array<i64: 2, 1>}, {transform_indices = @transform_3, window_bounds = array<i64: 2, 1>}, {transform_indices = @transform_4, window_bounds = array<i64: 2, 1>}]} {
    %c0 = arith.constant 0 : index
    %c0_0 = arith.constant 0 : index
    %c0_1 = arith.constant 0 : index
    %c0_2 = arith.constant 0 : index
    %0 = vector.load %arg1[%c0, %c0_0, %c0_1, %c0_2] : memref<2x1x8x128xf32, #tpu.memory_space<vmem>>, vector<2x1x8x128xf32>
    %c0_3 = arith.constant 0 : index
    %c0_4 = arith.constant 0 : index
    %c0_5 = arith.constant 0 : index
    %c0_6 = arith.constant 0 : index
    %1 = vector.load %arg2[%c0_3, %c0_4, %c0_5, %c0_6] : memref<2x1x8x128xf32, #tpu.memory_space<vmem>>, vector<2x1x8x128xf32>
    %cst = arith.constant 5.000000e-01 : f32
    %2 = vector.broadcast %cst : f32 to vector<2x1x8x128xf32>
    %3 = arith.mulf %2, %0 : vector<2x1x8x128xf32>
    %4 = math.tanh %3 : vector<2x1x8x128xf32>
    %cst_7 = arith.constant 5.000000e-01 : f32
    %5 = vector.broadcast %cst_7 : f32 to vector<2x1x8x128xf32>
    %6 = arith.mulf %5, %4 : vector<2x1x8x128xf32>
    %cst_8 = arith.constant 5.000000e-01 : f32
    %7 = vector.broadcast %cst_8 : f32 to vector<2x1x8x128xf32>
    %8 = arith.addf %6, %7 : vector<2x1x8x128xf32>
    %9 = arith.mulf %8, %1 : vector<2x1x8x128xf32>
    %cst_9 = arith.constant dense<0.000000e+00> : vector<2x8x128xf32>
    %10 = vector.multi_reduction <add>, %9, %cst_9 [1] : vector<2x1x8x128xf32> to vector<2x8x128xf32>
    %cst_10 = arith.constant dense<0.000000e+00> : vector<2x8xf32>
    %11 = vector.multi_reduction <add>, %10, %cst_10 [2] : vector<2x8x128xf32> to vector<2x8xf32>
    %cst_11 = arith.constant dense<0.000000e+00> : vector<2xf32>
    %12 = vector.multi_reduction <add>, %11, %cst_11 [1] : vector<2x8xf32> to vector<2xf32>
    %13 = vector.shape_cast %12 : vector<2xf32> to vector<2x1xf32>
    %c0_12 = arith.constant 0 : index
    %c0_13 = arith.constant 0 : index
    %14 = vector.load %arg3[%c0_12, %c0_13] : memref<2x1xf32, #tpu.memory_space<vmem>>, vector<2x1xf32>
    tpu.vector_store %arg3[%c0_12, %c0_13], %13 {strides = array<i32>} : memref<2x1xf32, #tpu.memory_space<vmem>>, vector<2x1xf32>,
    %cst_14 = arith.constant dense<0.000000e+00> : vector<2x8x128xf32>
    %15 = vector.multi_reduction <add>, %8, %cst_14 [1] : vector<2x1x8x128xf32> to vector<2x8x128xf32>
    %cst_15 = arith.constant dense<0.000000e+00> : vector<2x8xf32>
    %16 = vector.multi_reduction <add>, %15, %cst_15 [2] : vector<2x8x128xf32> to vector<2x8xf32>
    %cst_16 = arith.constant dense<0.000000e+00> : vector<2xf32>
    %17 = vector.multi_reduction <add>, %16, %cst_16 [1] : vector<2x8xf32> to vector<2xf32>
    %18 = vector.shape_cast %17 : vector<2xf32> to vector<2x1xf32>
    %c0_17 = arith.constant 0 : index
    %c0_18 = arith.constant 0 : index
    %19 = vector.load %arg4[%c0_17, %c0_18] : memref<2x1xf32, #tpu.memory_space<vmem>>, vector<2x1xf32>
    tpu.vector_store %arg4[%c0_17, %c0_18], %18 {strides = array<i32>} : memref<2x1xf32, #tpu.memory_space<vmem>>, vector<2x1xf32>,
    %cst_19 = arith.constant dense<0.000000e+00> : vector<2x8x128xf32>
    %20 = vector.multi_reduction <add>, %1, %cst_19 [1] : vector<2x1x8x128xf32> to vector<2x8x128xf32>
    %cst_20 = arith.constant dense<0.000000e+00> : vector<2x8xf32>
    %21 = vector.multi_reduction <add>, %20, %cst_20 [2] : vector<2x8x128xf32> to vector<2x8xf32>
    %cst_21 = arith.constant dense<0.000000e+00> : vector<2xf32>
    %22 = vector.multi_reduction <add>, %21, %cst_21 [1] : vector<2x8xf32> to vector<2xf32>
    %23 = vector.shape_cast %22 : vector<2xf32> to vector<2x1xf32>
    %c0_22 = arith.constant 0 : index
    %c0_23 = arith.constant 0 : index
    %24 = vector.load %arg5[%c0_22, %c0_23] : memref<2x1xf32, #tpu.memory_space<vmem>>, vector<2x1xf32>
    tpu.vector_store %arg5[%c0_22, %c0_23], %23 {strides = array<i32>} : memref<2x1xf32, #tpu.memory_space<vmem>>, vector<2x1xf32>,
    return
  }
  func.func @transform_0(%arg0: i32) -> (i32, i32, i32, i32) {
    %c0_i32 = arith.constant 0 : i32
    %c0_i32_0 = arith.constant 0 : i32
    %c0_i32_1 = arith.constant 0 : i32
    %c0_i32_2 = arith.constant 0 : i32
    return %arg0, %c0_i32, %c0_i32_0, %c0_i32_1 : i32, i32, i32, i32
  }
  func.func @transform_1(%arg0: i32) -> (i32, i32, i32, i32) {
    %c0_i32 = arith.constant 0 : i32
    %c0_i32_0 = arith.constant 0 : i32
    %c0_i32_1 = arith.constant 0 : i32
    %c0_i32_2 = arith.constant 0 : i32
    return %arg0, %c0_i32, %c0_i32_0, %c0_i32_1 : i32, i32, i32, i32
  }
  func.func @transform_2(%arg0: i32) -> (i32, i32) {
    %c0_i32 = arith.constant 0 : i32
    %c0_i32_0 = arith.constant 0 : i32
    return %arg0, %c0_i32 : i32, i32
  }
  func.func @transform_3(%arg0: i32) -> (i32, i32) {
    %c0_i32 = arith.constant 0 : i32
    %c0_i32_0 = arith.constant 0 : i32
    return %arg0, %c0_i32 : i32, i32
  }
  func.func @transform_4(%arg0: i32) -> (i32, i32) {
    %c0_i32 = arith.constant 0 : i32
    %c0_i32_0 = arith.constant 0 : i32
    return %arg0, %c0_i32 : i32, i32
  }
}

</mosaic_0001>

<llo_original>
// kernel: tpu_custom_call.1
$region0: #{tpu_custom_call.1}
  #allocation0 [shape = 'u32[]', space=smem, size = 0x4, offset = 0x4, fixed_abs, tag = 'smem constant byte address 0x4 - core index']
  #allocation1 [shape = 'u32[72,128]{1,0:T(1,128)}', space=vmem, size = 0x9000, scoped, tag = 'internal scratch']
  %s0 = inlined_call_operand.hbm [shape: f32[2,1,8,128], index: 0, kind: input, shape index: {}]
  %s1 = inlined_call_operand.hbm [shape: f32[2,1,8,128], index: 1, kind: input, shape index: {}]
  %s2 = inlined_call_operand.vmem [shape: f32[2,1], index: 2, kind: output, shape index: {0}]
  %s3 = inlined_call_operand.vmem [shape: f32[2,1], index: 3, kind: output, shape index: {1}]
  %s4 = inlined_call_operand.vmem [shape: f32[2,1], index: 4, kind: output, shape index: {2}]
  %5 = xla_tuple %s2, %s3, %s4
  %s6 = sld [smem:[#allocation0]]
  $region42: #{tpu_custom_call.1} parent=0
    _
  %s8 = ssub.s32 1, %s6
  %s9 = scalar_select 0, %s8, %s6
  $region1: #{tpu_custom_call.1} parent=0
    #allocation2 [shape = 'u8[8192]{0}', space=vmem, size = 0x2000, scoped, tag = 'input window, operand 0, single buffered']
    #allocation3 [shape = 's32[1]{0}', space=sflag, size = 0x4, scoped, tag = 'scoped memory for tpu_custom_call.1']
    #allocation4 [shape = 'u8[8192]{0}', space=vmem, size = 0x2000, scoped, tag = 'input window, operand 1, single buffered']
    #allocation5 [shape = 's32[1]{0}', space=sflag, size = 0x4, scoped, tag = 'scoped memory for tpu_custom_call.1']
    %10 = vsyncpa [#allocation3], 0
    %11 = vsyncpa [#allocation5], 0
    // Predicated region
    $region2: #{tpu_custom_call.1} parent=1 // pred_check
      _
    $region3: #{tpu_custom_call.1} parent=1 // pred_check_branch
      %13 = sbr.rel (0) target = $region5
    $region4: #{tpu_custom_call.1} parent=1 // pred_region
      %15 = vsyncadd [#allocation3], 0
      %s16 = sshll.u32 %s0, 4
      %s17 = int_to_ptr.hbm [resolvable:$true] %s16
      %s18 = sshll.u32 [#allocation2], 4
      %s19 = int_to_ptr.vmem [resolvable:$true] %s18
      %24 = dma.hbm_to_vmem [thread:$0]  %s17, 256, %s19, [#allocation3], 128, 128, 8
    $region5: #{tpu_custom_call.1} parent=1 // pred_fallthru
      _
    // Predicated region
    $region6: #{tpu_custom_call.1} parent=1 // pred_check
      _
    $region7: #{tpu_custom_call.1} parent=1 // pred_check_branch
      %26 = sbr.rel (0) target = $region9
    $region8: #{tpu_custom_call.1} parent=1 // pred_region
      %28 = vsyncadd [#allocation5], 0
      %s29 = sshll.u32 %s1, 4
      %s30 = int_to_ptr.hbm [resolvable:$true] %s29
      %s31 = sshll.u32 [#allocation4], 4
      %s32 = int_to_ptr.vmem [resolvable:$true] %s31
      %37 = dma.hbm_to_vmem [thread:$0]  %s30, 256, %s32, [#allocation5], 128, 128, 8
    $region9: #{tpu_custom_call.1} parent=1 // pred_fallthru
      _
    // Predicated region
    $region10: #{tpu_custom_call.1} parent=1 // pred_check
      _
    $region11: #{tpu_custom_call.1} parent=1 // pred_check_branch
      %39 = sbr.rel (0) target = $region13
    $region12: #{tpu_custom_call.1} parent=1 // pred_region
      %41 = dma.done [#allocation3], 256
    $region13: #{tpu_custom_call.1} parent=1 // pred_fallthru
      _
    // Predicated region
    $region14: #{tpu_custom_call.1} parent=1 // pred_check
      _
    $region15: #{tpu_custom_call.1} parent=1 // pred_check_branch
      %43 = sbr.rel (0) target = $region17
    $region16: #{tpu_custom_call.1} parent=1 // pred_region
      %45 = dma.done [#allocation5], 256
    $region17: #{tpu_custom_call.1} parent=1 // pred_fallthru
      _
    %v46 = vld [vmem:[#allocation2] sm:$0xff]
    %v47 = vld [vmem:[#allocation2 + $0x8] sm:$0xff]
    %v48 = vld [vmem:[#allocation4] sm:$0xff]
    %v49 = vld [vmem:[#allocation4 + $0x8] sm:$0xff]
    %v50 = vmul.f32 %v46, 0.5
    %v51 = vmul.f32 %v47, 0.5
    %v52 = vtanh.pop %v50
    %v53 = vtanh.pop %v51
    %v54 = vmul.f32 %v52, 0.5
    %v55 = vmul.f32 %v53, 0.5
    %v56 = vadd.f32 %v54, 0.5
    %v57 = vadd.f32 %v55, 0.5
    %v58 = vmul.f32 %v56, %v48
    %v59 = vmul.f32 %v57, %v49
    %v60 = vadd.f32 %v58, 0.0
    %v61 = vadd.f32 %v59, 0.0
    %62 = vadd.xlane.f32.xlu0 %v60
    %v63 = vpop.xlane.xlu0 %62
    %64 = vadd.xlane.f32.xlu0 %v61
    %v65 = vpop.xlane.xlu0 %64
    %v68 = vlaneseq
    %v69 = vand.u32 %v68, 127
    %v70 = vperm.slane %v63, %v69
    %v71 = vperm.slane %v65, %v69
    %vm72 = vcmask 1041409
    %v73 = vsel %vm72, %v71, %v70
    %vm75 = vcmask 58368
    %v76 = vsel %vm75, %v73, 0.0
    %77 = vadd.xlane.f32.xlu0 %v76
    %v78 = vpop.xlane.xlu0 %77
    %vm79 = vcmask 1024
    %80 = vst.msk [vmem:[%s2] sm:$0x3] %vm79, %v78
    %v81 = vadd.f32 %v56, 0.0
    %v82 = vadd.f32 %v57, 0.0
    %83 = vadd.xlane.f32.xlu0 %v81
    %v84 = vpop.xlane.xlu0 %83
    %85 = vadd.xlane.f32.xlu0 %v82
    %v86 = vpop.xlane.xlu0 %85
    %v89 = vperm.slane %v84, %v69
    %v90 = vperm.slane %v86, %v69
    %v91 = vsel %vm72, %v90, %v89
    %v93 = vsel %vm75, %v91, 0.0
    %94 = vadd.xlane.f32.xlu0 %v93
    %v95 = vpop.xlane.xlu0 %94
    %96 = vst.msk [vmem:[%s3] sm:$0x3] %vm79, %v95
    %v97 = vadd.f32 %v48, 0.0
    %v98 = vadd.f32 %v49, 0.0
    %99 = vadd.xlane.f32.xlu0 %v97
    %v100 = vpop.xlane.xlu0 %99
    %101 = vadd.xlane.f32.xlu0 %v98
    %v102 = vpop.xlane.xlu0 %101
    %v105 = vperm.slane %v100, %v69
    %v106 = vperm.slane %v102, %v69
    %v107 = vsel %vm72, %v106, %v105
    %v109 = vsel %vm75, %v107, 0.0
    %110 = vadd.xlane.f32.xlu0 %v109
    %v111 = vpop.xlane.xlu0 %110
    %112 = vst.msk [vmem:[%s4] sm:$0x3] %vm79, %v111
    // Predicated region
    $region18: #{tpu_custom_call.1} parent=1 // pred_check
      _
    $region19: #{tpu_custom_call.1} parent=1 // pred_check_branch
      %114 = sbr.rel (0) target = $region21
    $region20: #{tpu_custom_call.1} parent=1 // pred_region
      _
    $region21: #{tpu_custom_call.1} parent=1 // pred_fallthru
      _
    // Predicated region
    $region22: #{tpu_custom_call.1} parent=1 // pred_check
      _
    $region23: #{tpu_custom_call.1} parent=1 // pred_check_branch
      %116 = sbr.rel (0) target = $region25
    $region24: #{tpu_custom_call.1} parent=1 // pred_region
      _
    $region25: #{tpu_custom_call.1} parent=1 // pred_fallthru
      _
    // Predicated region
    $region26: #{tpu_custom_call.1} parent=1 // pred_check
      _
    $region27: #{tpu_custom_call.1} parent=1 // pred_check_branch
      %118 = sbr.rel (0) target = $region29
    $region28: #{tpu_custom_call.1} parent=1 // pred_region
      _
    $region29: #{tpu_custom_call.1} parent=1 // pred_fallthru
      _
    // Predicated region
    $region30: #{tpu_custom_call.1} parent=1 // pred_check
      _
    $region31: #{tpu_custom_call.1} parent=1 // pred_check_branch
      %120 = sbr.rel (0) target = $region33
    $region32: #{tpu_custom_call.1} parent=1 // pred_region
      _
    $region33: #{tpu_custom_call.1} parent=1 // pred_fallthru
      _
    // Predicated region
    $region34: #{tpu_custom_call.1} parent=1 // pred_check
      _
    $region35: #{tpu_custom_call.1} parent=1 // pred_check_branch
      %122 = sbr.rel (0) target = $region37
    $region36: #{tpu_custom_call.1} parent=1 // pred_region
      _
    $region37: #{tpu_custom_call.1} parent=1 // pred_fallthru
      _
    // Predicated region
    $region38: #{tpu_custom_call.1} parent=1 // pred_check
      _
    $region39: #{tpu_custom_call.1} parent=1 // pred_check_branch
      %124 = sbr.rel (0) target = $region41
    $region40: #{tpu_custom_call.1} parent=1 // pred_region
      _
    $region41: #{tpu_custom_call.1} parent=1 // pred_fallthru
      _
    %125 = vsyncpa [#allocation3], 1
    %126 = vsyncpa [#allocation5], 1

</llo_original>
